<compile_context>
chip_gen: v7x
topology: tpu7x:2x2x1
jax: 0.10.0
libtpu: 0.0.40
codegen_flags: <defaults>
</compile_context>

<pallas_src>
import jax
import jax.numpy as jnp
from jax.experimental import pallas as pl
from jax.experimental.pallas import tpu as pltpu


MAX_VAL = 30.0
_LANE = 128
# ~2 MiB per block -> in+out double-buffered = ~8 MiB pipelined VMEM.
# Fits v5e's 16 MiB default scoped VMEM and v7x's 32 MiB scoped budget.
_TARGET_BLOCK_BYTES = 2 * 1024 * 1024
# Below this total size, XLA's fused elementwise clip+exp is already at HBM
# roofline and the pallas_call fixed overhead would be a regression.
_SMALL_BYTES = 1 * 1024 * 1024
# Aim for at least this many (even) grid steps so the pipeline overlaps and
# both v7x TensorCores get work on the "parallel" axis.
_MIN_STEPS = 8
# Measured ~85% of HBM roofline knee; no point going below this per block.
_MIN_BLOCK_ROWS = 512


def safe_exp_kernel(x_ref, o_ref):
    # clip -> 2 VPU ops, exp -> EUP slot.  Keep math in the native dtype for
    # f32/bf16 (v6e/v7x have bf16 VPU+EUP paths); upcast anything else to f32.
    x = x_ref[...]
    if x.dtype not in (jnp.float32, jnp.bfloat16):
        x = x.astype(jnp.float32)
    x = jnp.clip(x, -MAX_VAL, MAX_VAL)
    o_ref[...] = jnp.exp(x).astype(o_ref.dtype)


def _xla_safe_exp(x: jax.Array) -> jax.Array:
    return jnp.exp(jnp.clip(x, -MAX_VAL, MAX_VAL)).astype(x.dtype)


def _round_up(v: int, m: int) -> int:
    return ((v + m - 1) // m) * m


def safe_exp(x: jax.Array) -> jax.Array:
    """Elementwise safe exp.  Any shape; uses a lane-dense (rows, 128) view."""
    orig_shape = x.shape
    orig_dtype = x.dtype
    n = x.size
    itemsize = jnp.dtype(orig_dtype).itemsize
    total_bytes = n * itemsize

    if n == 0:
        return x
    # Unaligned total size (would need a pad round-trip, ~2x HBM traffic) or
    # tiny tensors (custom-call overhead dominates): let XLA handle it.
    if n % _LANE != 0 or total_bytes < _SMALL_BYTES:
        return _xla_safe_exp(x)

    rows = n // _LANE
    x2d = x.reshape(rows, _LANE)  # contiguous row-major view, no copy

    # Sublane granularity per dtype: 8 (32-bit), 16 (16-bit), 32 (8-bit).
    sublane = 8 * max(1, 4 // itemsize)

    # Rows per ~2 MiB block, rounded down to the sublane granularity.
    target_rows = max(
        sublane, (_TARGET_BLOCK_BYTES // (_LANE * itemsize)) // sublane * sublane
    )

    # Pick an even step count of at least _MIN_STEPS, then derive block_rows,
    # clamped to [_MIN_BLOCK_ROWS, target_rows].
    steps = max(_MIN_STEPS, pl.cdiv(rows, target_rows))
    steps += steps % 2  # prefer even step counts for 2-TC balance on v7x
    block_rows = _round_up(pl.cdiv(rows, steps), sublane)
    block_rows = max(block_rows, _MIN_BLOCK_ROWS)
    block_rows = min(block_rows, target_rows)
    if block_rows >= rows:
        block_rows = rows  # full-extent block is always layout-legal
    grid = (pl.cdiv(rows, block_rows),)  # partial last block handled by Pallas

    cost = pl.CostEstimate(
        flops=0,
        transcendentals=n,
        bytes_accessed=2 * total_bytes,
    )

    out2d = pl.pallas_call(
        safe_exp_kernel,
        out_shape=jax.ShapeDtypeStruct((rows, _LANE), orig_dtype),
        grid_spec=pltpu.PrefetchScalarGridSpec(
            num_scalar_prefetch=0,
            grid=grid,
            in_specs=[pl.BlockSpec((block_rows, _LANE), lambda i: (i, 0))],
            out_specs=pl.BlockSpec((block_rows, _LANE), lambda i: (i, 0)),
        ),
        compiler_params=pltpu.CompilerParams(
            dimension_semantics=("parallel",),
        ),
        cost_estimate=cost,
    )(x2d)

    return out2d.reshape(orig_shape)


def init_parameters(input_size: int, output_size: int):
    """Deterministic parameter init mirroring SafeExp.init_parameters.
    (Unused by forward; provided for completeness.)"""
    weight = jnp.zeros((output_size, input_size), dtype=jnp.float32)  # fill_(0)
    bias = jnp.full((output_size,), -1.0, dtype=jnp.float32)          # fill_(-1)
    return weight, bias


if __name__ == "__main__":
    key = jax.random.PRNGKey(0)

    # Small NCHW input consistent with the module; scaled to exercise clamping
    # on both sides.  (Takes the small-size XLA fallback path by design.)
    x_small = jax.random.normal(key, (2, 4, 16, 16), dtype=jnp.float32) * 20.0
    weight, bias = init_parameters(input_size=16, output_size=16)  # unused in forward

    y_small = safe_exp(x_small)
    jax.block_until_ready(y_small)
    ref_small = jnp.exp(jnp.clip(x_small, -MAX_VAL, MAX_VAL))
    assert y_small.shape == x_small.shape and y_small.dtype == x_small.dtype
    assert jnp.allclose(y_small, ref_small, rtol=1e-6, atol=1e-6), "small f32 mismatch"

    # Larger inputs that exercise the multi-step Pallas pipeline (f32 + bf16).
    k1, k2 = jax.random.split(key)
    x_f32 = jax.random.normal(k1, (4, 8, 128, 128), dtype=jnp.float32) * 20.0
    y_f32 = safe_exp(x_f32)
    jax.block_until_ready(y_f32)
    ref_f32 = jnp.exp(jnp.clip(x_f32, -MAX_VAL, MAX_VAL))
    assert y_f32.shape == x_f32.shape and y_f32.dtype == x_f32.dtype
    assert jnp.allclose(y_f32, ref_f32, rtol=1e-6, atol=1e-6), "f32 mismatch"

    x_bf16 = (jax.random.normal(k2, (4, 8, 128, 128), dtype=jnp.float32) * 20.0).astype(
        jnp.bfloat16
    )
    y_bf16 = safe_exp(x_bf16)
    jax.block_until_ready(y_bf16)
    ref_bf16 = jnp.exp(jnp.clip(x_bf16.astype(jnp.float32), -MAX_VAL, MAX_VAL))
    assert y_bf16.shape == x_bf16.shape and y_bf16.dtype == jnp.bfloat16
    assert jnp.allclose(
        y_bf16.astype(jnp.float32), ref_bf16, rtol=5e-2, atol=1e-2
    ), "bf16 mismatch"

    print("KERNEL_OK")
</pallas_src>

<mosaic_0001>
module attributes {stable_mosaic.version = 11 : i64} {
  func.func @safe_exp_kernel(%arg0: i32, %arg1: memref<512x128xf32, #tpu.memory_space<vmem>>, %arg2: memref<512x128xf32, #tpu.memory_space<vmem>>) attributes {dimension_semantics = [#tpu.dimension_semantics<parallel>], iteration_bounds = array<i64: 8>, scalar_prefetch = 0 : i64, scratch_operands = 0 : i64, tpu.core_type = #tpu.core_type<tc>, window_params = [{transform_indices = @transform_0, window_bounds = array<i64: 512, 128>}, {transform_indices = @transform_1, window_bounds = array<i64: 512, 128>}]} {
    %c0 = arith.constant 0 : index
    %c0_0 = arith.constant 0 : index
    %0 = vector.load %arg1[%c0, %c0_0] : memref<512x128xf32, #tpu.memory_space<vmem>>, vector<512x128xf32>
    %cst = arith.constant -3.000000e+01 : f32
    %cst_1 = arith.constant 3.000000e+01 : f32
    %1 = vector.broadcast %cst : f32 to vector<512x128xf32>
    %2 = arith.maximumf %1, %0 : vector<512x128xf32>
    %3 = vector.broadcast %cst_1 : f32 to vector<512x128xf32>
    %4 = arith.minimumf %3, %2 : vector<512x128xf32>
    %5 = math.exp %4 : vector<512x128xf32>
    %c0_2 = arith.constant 0 : index
    %c0_3 = arith.constant 0 : index
    %6 = vector.load %arg2[%c0_2, %c0_3] : memref<512x128xf32, #tpu.memory_space<vmem>>, vector<512x128xf32>
    tpu.vector_store %arg2[%c0_2, %c0_3], %5 {strides = array<i32>} : memref<512x128xf32, #tpu.memory_space<vmem>>, vector<512x128xf32>,
    return
  }
  func.func @transform_0(%arg0: i32) -> (i32, i32) {
    %c0_i32 = arith.constant 0 : i32
    %c0_i32_0 = arith.constant 0 : i32
    return %arg0, %c0_i32 : i32, i32
  }
  func.func @transform_1(%arg0: i32) -> (i32, i32) {
    %c0_i32 = arith.constant 0 : i32
    %c0_i32_0 = arith.constant 0 : i32
    return %arg0, %c0_i32 : i32, i32
  }
}

</mosaic_0001>

<llo_original>
// kernel: tpu_custom_call.1
$region0: #{tpu_custom_call.1}
  #allocation0 [shape = 'u32[]', space=smem, size = 0x4, offset = 0x4, fixed_abs, tag = 'smem constant byte address 0x4 - core index']
  #allocation1 [shape = 'u32[144,128]{1,0:T(1,128)}', space=vmem, size = 0x12000, scoped, tag = 'internal scratch']
  %s0 = inlined_call_operand.hbm [shape: f32[4096,128], index: 0, kind: input, shape index: {}]
  %s1 = inlined_call_operand.hbm [shape: f32[4096,128], index: 1, kind: output, shape index: {}]
  %s2 = sld [smem:[#allocation0]]
  $region41: #{tpu_custom_call.1} parent=0
    _
  %s4 = ssub.s32 1, %s2
  %s5 = scalar_select 0, %s4, %s2
  $region1: #{tpu_custom_call.1} parent=0
    #allocation2 [shape = 'u8[524288]{0}', space=vmem, size = 0x80000, scoped, tag = 'input window, operand 0']
    #allocation3 [shape = 's32[2]{0}', space=sflag, size = 0x8, scoped, tag = 'scoped memory for tpu_custom_call.1']
    #allocation4 [shape = 's32[2]{0}', space=sflag, size = 0x8, scoped, tag = 'scoped memory for tpu_custom_call.1']
    #allocation5 [shape = 'u8[524288]{0}', space=vmem, size = 0x80000, scoped, tag = 'output window, operand 0']
    %6 = vsyncpa [#allocation3], 0
    %s7 = scalar_lea.sflag [#allocation3], 1
    %8 = vsyncpa %s7, 0
    %9 = vsyncpa [#allocation4], 0
    %s10 = scalar_lea.sflag [#allocation4], 1
    %11 = vsyncpa %s10, 0
    loop: start=0, step=1, limit=10
    $region2: #{tpu_custom_call.1} parent=1 // loop_pre_header
      _
    $region3: #{tpu_custom_call.1} parent=1 // loop_header
      %s13 = sphi 0, %s17
      %p14 = scmp.ge.s32.totalorder %s13, 10
      %s23 = sphi 0, %s25
      %s26 = sphi 0, %s23
      %s27 = sphi 0, %s26
      %s43 = sphi 0, %s27
      %s49 = sphi 0, %s51
      %s52 = sphi 0, %s49
      %s53 = sphi 0, %s52
      %s69 = sphi 0, %s53
    $region4: #{tpu_custom_call.1} parent=1 // loop_header_branch
      %16 = sbr.rel (%p14) target = $region8
    $region5: #{tpu_custom_call.1} parent=1 // loop_body
      %s18 = ssub.s32 %s13, 1
      %s19 = ssub.s32 %s13, 2
      %s20 = sadd.s32 %s13, 1
      %s21 = ssub.s32 %s13, %s20
      %p22 = scmp.eq.s32.totalorder %s21, 0
      %s24 = sadd.s32 %s23, 1
      %s25 = scalar_select %p22, %s23, %s24
      %p28 = pneg %p22
      %p29 = scmp.eq.s32.totalorder %s13, 7
      %p30 = por %p28, %p29
      %p31 = scmp.ne.s32.totalorder %s23, %s26
      %p32 = scmp.eq.s32.totalorder %s13, 0
      %p33 = por %p31, %p32
      %p34 = scmp.ne.s32.totalorder %s23, %s26
      %p35 = scmp.eq.s32.totalorder %s18, 7
      %p36 = por %p34, %p35
      %p37 = scmp.ne.s32.totalorder %s26, %s27
      %p38 = scmp.eq.s32.totalorder %s18, 0
      %p39 = por %p37, %p38
      %p40 = scmp.ne.s32.totalorder %s26, %s27
      %p41 = scmp.eq.s32.totalorder %s19, 7
      %p42 = por %p40, %p41
      %p44 = scmp.ne.s32.totalorder %s27, %s43
      %p45 = scmp.eq.s32.totalorder %s19, 0
      %p46 = por %p44, %p45
      %s47 = ssub.s32 %s13, %s20
      %p48 = scmp.eq.s32.totalorder %s47, 0
      %s50 = sadd.s32 %s49, 1
      %s51 = scalar_select %p48, %s49, %s50
      %p54 = pneg %p48
      %p55 = scmp.eq.s32.totalorder %s13, 7
      %p56 = por %p54, %p55
      %p57 = scmp.ne.s32.totalorder %s49, %s52
      %p58 = scmp.eq.s32.totalorder %s13, 0
      %p59 = por %p57, %p58
      %p60 = scmp.ne.s32.totalorder %s49, %s52
      %p61 = scmp.eq.s32.totalorder %s18, 7
      %p62 = por %p60, %p61
      %p63 = scmp.ne.s32.totalorder %s52, %s53
      %p64 = scmp.eq.s32.totalorder %s18, 0
      %p65 = por %p63, %p64
      %p66 = scmp.ne.s32.totalorder %s52, %s53
      %p67 = scmp.eq.s32.totalorder %s19, 7
      %p68 = por %p66, %p67
      %p70 = scmp.ne.s32.totalorder %s53, %s69
      %p71 = scmp.eq.s32.totalorder %s19, 0
      %p72 = por %p70, %p71
      %p73 = scmp.le.s32.totalorder 1, %s13
      %p74 = scmp.lt.s32.totalorder %s13, 9
      %p75 = pnand %p73, %p74
      %p76 = pneg %p75
      // Predicated region
      $region9: #{tpu_custom_call.1} parent=5 // pred_check
        _
      $region10: #{tpu_custom_call.1} parent=5 // pred_check_branch
        %78 = sbr.rel (%p75) target = $region12
      $region11: #{tpu_custom_call.1} parent=5 // pred_region
        %s79 = ssub.s32 %s13, 1
      $region12: #{tpu_custom_call.1} parent=5 // pred_fallthru
        _
      %p80 = scmp.lt.s32.totalorder %s13, 8
      // Predicated region
      $region13: #{tpu_custom_call.1} parent=5 // pred_check
        %p81 = pneg %p80
      $region14: #{tpu_custom_call.1} parent=5 // pred_check_branch
        %83 = sbr.rel (%p81) target = $region16
      $region15: #{tpu_custom_call.1} parent=5 // pred_region
        // Predicated region
        $region17: #{tpu_custom_call.1} parent=15 // pred_check
          %p84 = pneg %p33
        $region18: #{tpu_custom_call.1} parent=15 // pred_check_branch
          %86 = sbr.rel (%p84) target = $region20
        $region19: #{tpu_custom_call.1} parent=15 // pred_region
          %s87 = sand.u32 %s23, 1
          %s88 = scalar_lea.sflag [#allocation3], %s87
          %s89 = sand.u32 %s23, 1
          %s90 = smul.addr %s89, 512
          %s91 = scalar_lea.vmem [#allocation2], %s90
          %s92 = smul.u32 64, %s13
          %s94 = ssub.s32 8192, 8192
          %95 = vsyncadd %s88, %s94
          %s96 = smul.addr %s92, 128
          %s97 = scalar_lea.hbm %s0, %s96
          %s98 = sshll.u32 %s91, 4
          %s99 = int_to_ptr.vmem [resolvable:$true] %s98
          %104 = dma.hbm_to_vmem [thread:$0]  %s97, 8192, %s99, %s88, 128, 128, 8
        $region20: #{tpu_custom_call.1} parent=15 // pred_fallthru
          _
      $region16: #{tpu_custom_call.1} parent=5 // pred_fallthru
        _
      %p105 = scmp.le.s32.totalorder 1, %s13
      %p106 = scmp.lt.s32.totalorder %s13, 9
      %p107 = pnand %p105, %p106
      %p108 = pneg %p107
      // Predicated region
      $region21: #{tpu_custom_call.1} parent=5 // pred_check
        _
      $region22: #{tpu_custom_call.1} parent=5 // pred_check_branch
        %110 = sbr.rel (%p107) target = $region24
      $region23: #{tpu_custom_call.1} parent=5 // pred_region
        %s111 = ssub.s32 %s13, 1
        %s112 = sand.u32 %s26, 1
        %s113 = scalar_lea.sflag [#allocation3], %s112
        %s114 = sand.u32 %s26, 1
        %s115 = smul.addr %s114, 512
        %s116 = scalar_lea.vmem [#allocation2], %s115
        // Predicated region
        $region25: #{tpu_custom_call.1} parent=23 // pred_check
          %p117 = pneg %p39
        $region26: #{tpu_custom_call.1} parent=23 // pred_check_branch
          %119 = sbr.rel (%p117) target = $region28
        $region27: #{tpu_custom_call.1} parent=23 // pred_region
          %120 = dma.done %s113, 8192
        $region28: #{tpu_custom_call.1} parent=23 // pred_fallthru
          _
        %s121 = sand.u32 %s26, 1
        %s122 = scalar_lea.sflag [#allocation3], %s121
        %s123 = sand.u32 %s26, 1
        %s124 = smul.addr %s123, 512
        %s125 = scalar_lea.vmem [#allocation2], %s124
        %p126 = pneg %p39
        %p127 = pneg %p36
        %p128 = pneg %p65
        %p129 = pneg %p62
        %s130 = sand.u32 %s52, 1
        %s131 = scalar_lea.sflag [#allocation4], %s130
        %s132 = sand.u32 %s52, 1
        %s133 = smul.addr %s132, 512
        %s134 = scalar_lea.vmem [#allocation5], %s133
        %s135 = smul.u32 64, %s18
        %s136 = smul.u32 64, %s18
        %v137 = vld [vmem:[%s116] sm:$0xff]
        %v138 = vld [vmem:[%s116 + $0x8] sm:$0xff]
        %v139 = vld [vmem:[%s116 + $0x10] sm:$0xff]
        %v140 = vld [vmem:[%s116 + $0x18] sm:$0xff]
        %v141 = vld [vmem:[%s116 + $0x20] sm:$0xff]
        %v142 = vld [vmem:[%s116 + $0x28] sm:$0xff]
        %v143 = vld [vmem:[%s116 + $0x30] sm:$0xff]
        %v144 = vld [vmem:[%s116 + $0x38] sm:$0xff]
        %v145 = vld [vmem:[%s116 + $0x40] sm:$0xff]
        %v146 = vld [vmem:[%s116 + $0x48] sm:$0xff]
        %v147 = vld [vmem:[%s116 + $0x50] sm:$0xff]
        %v148 = vld [vmem:[%s116 + $0x58] sm:$0xff]
        %v149 = vld [vmem:[%s116 + $0x60] sm:$0xff]
        %v150 = vld [vmem:[%s116 + $0x68] sm:$0xff]
        %v151 = vld [vmem:[%s116 + $0x70] sm:$0xff]
        %v152 = vld [vmem:[%s116 + $0x78] sm:$0xff]
        %v153 = vld [vmem:[%s116 + $0x80] sm:$0xff]
        %v154 = vld [vmem:[%s116 + $0x88] sm:$0xff]
        %v155 = vld [vmem:[%s116 + $0x90] sm:$0xff]
        %v156 = vld [vmem:[%s116 + $0x98] sm:$0xff]
        %v157 = vld [vmem:[%s116 + $0xa0] sm:$0xff]
        %v158 = vld [vmem:[%s116 + $0xa8] sm:$0xff]
        %v159 = vld [vmem:[%s116 + $0xb0] sm:$0xff]
        %v160 = vld [vmem:[%s116 + $0xb8] sm:$0xff]
        %v161 = vld [vmem:[%s116 + $0xc0] sm:$0xff]
        %v162 = vld [vmem:[%s116 + $0xc8] sm:$0xff]
        %v163 = vld [vmem:[%s116 + $0xd0] sm:$0xff]
        %v164 = vld [vmem:[%s116 + $0xd8] sm:$0xff]
        %v165 = vld [vmem:[%s116 + $0xe0] sm:$0xff]
        %v166 = vld [vmem:[%s116 + $0xe8] sm:$0xff]
        %v167 = vld [vmem:[%s116 + $0xf0] sm:$0xff]
        %v168 = vld [vmem:[%s116 + $0xf8] sm:$0xff]
        %v169 = vld [vmem:[%s116 + $0x100] sm:$0xff]
        %v170 = vld [vmem:[%s116 + $0x108] sm:$0xff]
        %v171 = vld [vmem:[%s116 + $0x110] sm:$0xff]
        %v172 = vld [vmem:[%s116 + $0x118] sm:$0xff]
        %v173 = vld [vmem:[%s116 + $0x120] sm:$0xff]
        %v174 = vld [vmem:[%s116 + $0x128] sm:$0xff]
        %v175 = vld [vmem:[%s116 + $0x130] sm:$0xff]
        %v176 = vld [vmem:[%s116 + $0x138] sm:$0xff]
        %v177 = vld [vmem:[%s116 + $0x140] sm:$0xff]
        %v178 = vld [vmem:[%s116 + $0x148] sm:$0xff]
        %v179 = vld [vmem:[%s116 + $0x150] sm:$0xff]
        %v180 = vld [vmem:[%s116 + $0x158] sm:$0xff]
        %v181 = vld [vmem:[%s116 + $0x160] sm:$0xff]
        %v182 = vld [vmem:[%s116 + $0x168] sm:$0xff]
        %v183 = vld [vmem:[%s116 + $0x170] sm:$0xff]
        %v184 = vld [vmem:[%s116 + $0x178] sm:$0xff]
        %v185 = vld [vmem:[%s116 + $0x180] sm:$0xff]
        %v186 = vld [vmem:[%s116 + $0x188] sm:$0xff]
        %v187 = vld [vmem:[%s116 + $0x190] sm:$0xff]
        %v188 = vld [vmem:[%s116 + $0x198] sm:$0xff]
        %v189 = vld [vmem:[%s116 + $0x1a0] sm:$0xff]
        %v190 = vld [vmem:[%s116 + $0x1a8] sm:$0xff]
        %v191 = vld [vmem:[%s116 + $0x1b0] sm:$0xff]
        %v192 = vld [vmem:[%s116 + $0x1b8] sm:$0xff]
        %v193 = vld [vmem:[%s116 + $0x1c0] sm:$0xff]
        %v194 = vld [vmem:[%s116 + $0x1c8] sm:$0xff]
        %v195 = vld [vmem:[%s116 + $0x1d0] sm:$0xff]
        %v196 = vld [vmem:[%s116 + $0x1d8] sm:$0xff]
        %v197 = vld [vmem:[%s116 + $0x1e0] sm:$0xff]
        %v198 = vld [vmem:[%s116 + $0x1e8] sm:$0xff]
        %v199 = vld [vmem:[%s116 + $0x1f0] sm:$0xff]
        %v200 = vld [vmem:[%s116 + $0x1f8] sm:$0xff]
        %v201 = vmax.f32 %v137, -30.0
        %v202 = vmax.f32 %v138, -30.0
        %v203 = vmax.f32 %v139, -30.0
        %v204 = vmax.f32 %v140, -30.0
        %v205 = vmax.f32 %v141, -30.0
        %v206 = vmax.f32 %v142, -30.0
        %v207 = vmax.f32 %v143, -30.0
        %v208 = vmax.f32 %v144, -30.0
        %v209 = vmax.f32 %v145, -30.0
        %v210 = vmax.f32 %v146, -30.0
        %v211 = vmax.f32 %v147, -30.0
        %v212 = vmax.f32 %v148, -30.0
        %v213 = vmax.f32 %v149, -30.0
        %v214 = vmax.f32 %v150, -30.0
        %v215 = vmax.f32 %v151, -30.0
        %v216 = vmax.f32 %v152, -30.0
        %v217 = vmax.f32 %v153, -30.0
        %v218 = vmax.f32 %v154, -30.0
        %v219 = vmax.f32 %v155, -30.0
        %v220 = vmax.f32 %v156, -30.0
        %v221 = vmax.f32 %v157, -30.0
        %v222 = vmax.f32 %v158, -30.0
        %v223 = vmax.f32 %v159, -30.0
        %v224 = vmax.f32 %v160, -30.0
        %v225 = vmax.f32 %v161, -30.0
        %v226 = vmax.f32 %v162, -30.0
        %v227 = vmax.f32 %v163, -30.0
        %v228 = vmax.f32 %v164, -30.0
        %v229 = vmax.f32 %v165, -30.0
        %v230 = vmax.f32 %v166, -30.0
        %v231 = vmax.f32 %v167, -30.0
        %v232 = vmax.f32 %v168, -30.0
        %v233 = vmax.f32 %v169, -30.0
        %v234 = vmax.f32 %v170, -30.0
        %v235 = vmax.f32 %v171, -30.0
        %v236 = vmax.f32 %v172, -30.0
        %v237 = vmax.f32 %v173, -30.0
        %v238 = vmax.f32 %v174, -30.0
        %v239 = vmax.f32 %v175, -30.0
        %v240 = vmax.f32 %v176, -30.0
        %v241 = vmax.f32 %v177, -30.0
        %v242 = vmax.f32 %v178, -30.0
        %v243 = vmax.f32 %v179, -30.0
        %v244 = vmax.f32 %v180, -30.0
        %v245 = vmax.f32 %v181, -30.0
        %v246 = vmax.f32 %v182, -30.0
        %v247 = vmax.f32 %v183, -30.0
        %v248 = vmax.f32 %v184, -30.0
        %v249 = vmax.f32 %v185, -30.0
        %v250 = vmax.f32 %v186, -30.0
        %v251 = vmax.f32 %v187, -30.0
        %v252 = vmax.f32 %v188, -30.0
        %v253 = vmax.f32 %v189, -30.0
        %v254 = vmax.f32 %v190, -30.0
        %v255 = vmax.f32 %v191, -30.0
        %v256 = vmax.f32 %v192, -30.0
        %v257 = vmax.f32 %v193, -30.0
        %v258 = vmax.f32 %v194, -30.0
        %v259 = vmax.f32 %v195, -30.0
        %v260 = vmax.f32 %v196, -30.0
        %v261 = vmax.f32 %v197, -30.0
        %v262 = vmax.f32 %v198, -30.0
        %v263 = vmax.f32 %v199, -30.0
        %v264 = vmax.f32 %v200, -30.0
        %v265 = vmin.f32 %v201, 30.0
        %v266 = vmin.f32 %v202, 30.0
        %v267 = vmin.f32 %v203, 30.0
        %v268 = vmin.f32 %v204, 30.0
        %v269 = vmin.f32 %v205, 30.0
        %v270 = vmin.f32 %v206, 30.0
        %v271 = vmin.f32 %v207, 30.0
        %v272 = vmin.f32 %v208, 30.0
        %v273 = vmin.f32 %v209, 30.0
        %v274 = vmin.f32 %v210, 30.0
        %v275 = vmin.f32 %v211, 30.0
        %v276 = vmin.f32 %v212, 30.0
        %v277 = vmin.f32 %v213, 30.0
        %v278 = vmin.f32 %v214, 30.0
        %v279 = vmin.f32 %v215, 30.0
        %v280 = vmin.f32 %v216, 30.0
        %v281 = vmin.f32 %v217, 30.0
        %v282 = vmin.f32 %v218, 30.0
        %v283 = vmin.f32 %v219, 30.0
        %v284 = vmin.f32 %v220, 30.0
        %v285 = vmin.f32 %v221, 30.0
        %v286 = vmin.f32 %v222, 30.0
        %v287 = vmin.f32 %v223, 30.0
        %v288 = vmin.f32 %v224, 30.0
        %v289 = vmin.f32 %v225, 30.0
        %v290 = vmin.f32 %v226, 30.0
        %v291 = vmin.f32 %v227, 30.0
        %v292 = vmin.f32 %v228, 30.0
        %v293 = vmin.f32 %v229, 30.0
        %v294 = vmin.f32 %v230, 30.0
        %v295 = vmin.f32 %v231, 30.0
        %v296 = vmin.f32 %v232, 30.0
        %v297 = vmin.f32 %v233, 30.0
        %v298 = vmin.f32 %v234, 30.0
        %v299 = vmin.f32 %v235, 30.0
        %v300 = vmin.f32 %v236, 30.0
        %v301 = vmin.f32 %v237, 30.0
        %v302 = vmin.f32 %v238, 30.0
        %v303 = vmin.f32 %v239, 30.0
        %v304 = vmin.f32 %v240, 30.0
        %v305 = vmin.f32 %v241, 30.0
        %v306 = vmin.f32 %v242, 30.0
        %v307 = vmin.f32 %v243, 30.0
        %v308 = vmin.f32 %v244, 30.0
        %v309 = vmin.f32 %v245, 30.0
        %v310 = vmin.f32 %v246, 30.0
        %v311 = vmin.f32 %v247, 30.0
        %v312 = vmin.f32 %v248, 30.0
        %v313 = vmin.f32 %v249, 30.0
        %v314 = vmin.f32 %v250, 30.0
        %v315 = vmin.f32 %v251, 30.0
        %v316 = vmin.f32 %v252, 30.0
        %v317 = vmin.f32 %v253, 30.0
        %v318 = vmin.f32 %v254, 30.0
        %v319 = vmin.f32 %v255, 30.0
        %v320 = vmin.f32 %v256, 30.0
        %v321 = vmin.f32 %v257, 30.0
        %v322 = vmin.f32 %v258, 30.0
        %v323 = vmin.f32 %v259, 30.0
        %v324 = vmin.f32 %v260, 30.0
        %v325 = vmin.f32 %v261, 30.0
        %v326 = vmin.f32 %v262, 30.0
        %v327 = vmin.f32 %v263, 30.0
        %v328 = vmin.f32 %v264, 30.0
        %v329 = vmul.f32 %v265, 1.442695
        %v330 = vpow.pop %v329
        %v331 = vmul.f32 %v266, 1.442695
        %v332 = vpow.pop %v331
        %v333 = vmul.f32 %v267, 1.442695
        %v334 = vpow.pop %v333
        %v335 = vmul.f32 %v268, 1.442695
        %v336 = vpow.pop %v335
        %v337 = vmul.f32 %v269, 1.442695
        %v338 = vpow.pop %v337
        %v339 = vmul.f32 %v270, 1.442695
        %v340 = vpow.pop %v339
        %v341 = vmul.f32 %v271, 1.442695
        %v342 = vpow.pop %v341
        %v343 = vmul.f32 %v272, 1.442695
        %v344 = vpow.pop %v343
        %v345 = vmul.f32 %v273, 1.442695
        %v346 = vpow.pop %v345
        %v347 = vmul.f32 %v274, 1.442695
        %v348 = vpow.pop %v347
        %v349 = vmul.f32 %v275, 1.442695
        %v350 = vpow.pop %v349
        %v351 = vmul.f32 %v276, 1.442695
        %v352 = vpow.pop %v351
        %v353 = vmul.f32 %v277, 1.442695
        %v354 = vpow.pop %v353
        %v355 = vmul.f32 %v278, 1.442695
        %v356 = vpow.pop %v355
        %v357 = vmul.f32 %v279, 1.442695
        %v358 = vpow.pop %v357
        %v359 = vmul.f32 %v280, 1.442695
        %v360 = vpow.pop %v359
        %v361 = vmul.f32 %v281, 1.442695
        %v362 = vpow.pop %v361
        %v363 = vmul.f32 %v282, 1.442695
        %v364 = vpow.pop %v363
        %v365 = vmul.f32 %v283, 1.442695
        %v366 = vpow.pop %v365
        %v367 = vmul.f32 %v284, 1.442695
        %v368 = vpow.pop %v367
        %v369 = vmul.f32 %v285, 1.442695
        %v370 = vpow.pop %v369
        %v371 = vmul.f32 %v286, 1.442695
        %v372 = vpow.pop %v371
        %v373 = vmul.f32 %v287, 1.442695
        %v374 = vpow.pop %v373
        %v375 = vmul.f32 %v288, 1.442695
        %v376 = vpow.pop %v375
        %v377 = vmul.f32 %v289, 1.442695
        %v378 = vpow.pop %v377
        %v379 = vmul.f32 %v290, 1.442695
        %v380 = vpow.pop %v379
        %v381 = vmul.f32 %v291, 1.442695
        %v382 = vpow.pop %v381
        %v383 = vmul.f32 %v292, 1.442695
        %v384 = vpow.pop %v383
        %v385 = vmul.f32 %v293, 1.442695
        %v386 = vpow.pop %v385
        %v387 = vmul.f32 %v294, 1.442695
        %v388 = vpow.pop %v387
        %v389 = vmul.f32 %v295, 1.442695
        %v390 = vpow.pop %v389
        %v391 = vmul.f32 %v296, 1.442695
        %v392 = vpow.pop %v391
        %v393 = vmul.f32 %v297, 1.442695
        %v394 = vpow.pop %v393
        %v395 = vmul.f32 %v298, 1.442695
        %v396 = vpow.pop %v395
        %v397 = vmul.f32 %v299, 1.442695
        %v398 = vpow.pop %v397
        %v399 = vmul.f32 %v300, 1.442695
        %v400 = vpow.pop %v399
        %v401 = vmul.f32 %v301, 1.442695
        %v402 = vpow.pop %v401
        %v403 = vmul.f32 %v302, 1.442695
        %v404 = vpow.pop %v403
        %v405 = vmul.f32 %v303, 1.442695
        %v406 = vpow.pop %v405
        %v407 = vmul.f32 %v304, 1.442695
        %v408 = vpow.pop %v407
        %v409 = vmul.f32 %v305, 1.442695
        %v410 = vpow.pop %v409
        %v411 = vmul.f32 %v306, 1.442695
        %v412 = vpow.pop %v411
        %v413 = vmul.f32 %v307, 1.442695
        %v414 = vpow.pop %v413
        %v415 = vmul.f32 %v308, 1.442695
        %v416 = vpow.pop %v415
        %v417 = vmul.f32 %v309, 1.442695
        %v418 = vpow.pop %v417
        %v419 = vmul.f32 %v310, 1.442695
        %v420 = vpow.pop %v419
        %v421 = vmul.f32 %v311, 1.442695
        %v422 = vpow.pop %v421
        %v423 = vmul.f32 %v312, 1.442695
        %v424 = vpow.pop %v423
        %v425 = vmul.f32 %v313, 1.442695
        %v426 = vpow.pop %v425
        %v427 = vmul.f32 %v314, 1.442695
        %v428 = vpow.pop %v427
        %v429 = vmul.f32 %v315, 1.442695
        %v430 = vpow.pop %v429
        %v431 = vmul.f32 %v316, 1.442695
        %v432 = vpow.pop %v431
        %v433 = vmul.f32 %v317, 1.442695
        %v434 = vpow.pop %v433
        %v435 = vmul.f32 %v318, 1.442695
        %v436 = vpow.pop %v435
        %v437 = vmul.f32 %v319, 1.442695
        %v438 = vpow.pop %v437
        %v439 = vmul.f32 %v320, 1.442695
        %v440 = vpow.pop %v439
        %v441 = vmul.f32 %v321, 1.442695
        %v442 = vpow.pop %v441
        %v443 = vmul.f32 %v322, 1.442695
        %v444 = vpow.pop %v443
        %v445 = vmul.f32 %v323, 1.442695
        %v446 = vpow.pop %v445
        %v447 = vmul.f32 %v324, 1.442695
        %v448 = vpow.pop %v447
        %v449 = vmul.f32 %v325, 1.442695
        %v450 = vpow.pop %v449
        %v451 = vmul.f32 %v326, 1.442695
        %v452 = vpow.pop %v451
        %v453 = vmul.f32 %v327, 1.442695
        %v454 = vpow.pop %v453
        %v455 = vmul.f32 %v328, 1.442695
        %v456 = vpow.pop %v455
        %457 = vst [vmem:[%s134] sm:$0xff] %v330
        %458 = vst [vmem:[%s134 + $0x8] sm:$0xff] %v332
        %459 = vst [vmem:[%s134 + $0x10] sm:$0xff] %v334
        %460 = vst [vmem:[%s134 + $0x18] sm:$0xff] %v336
        %461 = vst [vmem:[%s134 + $0x20] sm:$0xff] %v338
        %462 = vst [vmem:[%s134 + $0x28] sm:$0xff] %v340
        %463 = vst [vmem:[%s134 + $0x30] sm:$0xff] %v342
        %464 = vst [vmem:[%s134 + $0x38] sm:$0xff] %v344
        %465 = vst [vmem:[%s134 + $0x40] sm:$0xff] %v346
        %466 = vst [vmem:[%s134 + $0x48] sm:$0xff] %v348
        %467 = vst [vmem:[%s134 + $0x50] sm:$0xff] %v350
        %468 = vst [vmem:[%s134 + $0x58] sm:$0xff] %v352
        %469 = vst [vmem:[%s134 + $0x60] sm:$0xff] %v354
        %470 = vst [vmem:[%s134 + $0x68] sm:$0xff] %v356
        %471 = vst [vmem:[%s134 + $0x70] sm:$0xff] %v358
        %472 = vst [vmem:[%s134 + $0x78] sm:$0xff] %v360
        %473 = vst [vmem:[%s134 + $0x80] sm:$0xff] %v362
        %474 = vst [vmem:[%s134 + $0x88] sm:$0xff] %v364
        %475 = vst [vmem:[%s134 + $0x90] sm:$0xff] %v366
        %476 = vst [vmem:[%s134 + $0x98] sm:$0xff] %v368
        %477 = vst [vmem:[%s134 + $0xa0] sm:$0xff] %v370
        %478 = vst [vmem:[%s134 + $0xa8] sm:$0xff] %v372
        %479 = vst [vmem:[%s134 + $0xb0] sm:$0xff] %v374
        %480 = vst [vmem:[%s134 + $0xb8] sm:$0xff] %v376
        %481 = vst [vmem:[%s134 + $0xc0] sm:$0xff] %v378
        %482 = vst [vmem:[%s134 + $0xc8] sm:$0xff] %v380
        %483 = vst [vmem:[%s134 + $0xd0] sm:$0xff] %v382
        %484 = vst [vmem:[%s134 + $0xd8] sm:$0xff] %v384
        %485 = vst [vmem:[%s134 + $0xe0] sm:$0xff] %v386
        %486 = vst [vmem:[%s134 + $0xe8] sm:$0xff] %v388
        %487 = vst [vmem:[%s134 + $0xf0] sm:$0xff] %v390
        %488 = vst [vmem:[%s134 + $0xf8] sm:$0xff] %v392
        %489 = vst [vmem:[%s134 + $0x100] sm:$0xff] %v394
        %490 = vst [vmem:[%s134 + $0x108] sm:$0xff] %v396
        %491 = vst [vmem:[%s134 + $0x110] sm:$0xff] %v398
        %492 = vst [vmem:[%s134 + $0x118] sm:$0xff] %v400
        %493 = vst [vmem:[%s134 + $0x120] sm:$0xff] %v402
        %494 = vst [vmem:[%s134 + $0x128] sm:$0xff] %v404
        %495 = vst [vmem:[%s134 + $0x130] sm:$0xff] %v406
        %496 = vst [vmem:[%s134 + $0x138] sm:$0xff] %v408
        %497 = vst [vmem:[%s134 + $0x140] sm:$0xff] %v410
        %498 = vst [vmem:[%s134 + $0x148] sm:$0xff] %v412
        %499 = vst [vmem:[%s134 + $0x150] sm:$0xff] %v414
        %500 = vst [vmem:[%s134 + $0x158] sm:$0xff] %v416
        %501 = vst [vmem:[%s134 + $0x160] sm:$0xff] %v418
        %502 = vst [vmem:[%s134 + $0x168] sm:$0xff] %v420
        %503 = vst [vmem:[%s134 + $0x170] sm:$0xff] %v422
        %504 = vst [vmem:[%s134 + $0x178] sm:$0xff] %v424
        %505 = vst [vmem:[%s134 + $0x180] sm:$0xff] %v426
        %506 = vst [vmem:[%s134 + $0x188] sm:$0xff] %v428
        %507 = vst [vmem:[%s134 + $0x190] sm:$0xff] %v430
        %508 = vst [vmem:[%s134 + $0x198] sm:$0xff] %v432
        %509 = vst [vmem:[%s134 + $0x1a0] sm:$0xff] %v434
        %510 = vst [vmem:[%s134 + $0x1a8] sm:$0xff] %v436
        %511 = vst [vmem:[%s134 + $0x1b0] sm:$0xff] %v438
        %512 = vst [vmem:[%s134 + $0x1b8] sm:$0xff] %v440
        %513 = vst [vmem:[%s134 + $0x1c0] sm:$0xff] %v442
        %514 = vst [vmem:[%s134 + $0x1c8] sm:$0xff] %v444
        %515 = vst [vmem:[%s134 + $0x1d0] sm:$0xff] %v446
        %516 = vst [vmem:[%s134 + $0x1d8] sm:$0xff] %v448
        %517 = vst [vmem:[%s134 + $0x1e0] sm:$0xff] %v450
        %518 = vst [vmem:[%s134 + $0x1e8] sm:$0xff] %v452
        %519 = vst [vmem:[%s134 + $0x1f0] sm:$0xff] %v454
        %520 = vst [vmem:[%s134 + $0x1f8] sm:$0xff] %v456
        %s521 = sand.u32 %s52, 1
        %s522 = scalar_lea.sflag [#allocation4], %s521
        %s523 = sand.u32 %s52, 1
        %s524 = smul.addr %s523, 512
        %s525 = scalar_lea.vmem [#allocation5], %s524
        // Predicated region
        $region29: #{tpu_custom_call.1} parent=23 // pred_check
          %p526 = pneg %p62
        $region30: #{tpu_custom_call.1} parent=23 // pred_check_branch
          %528 = sbr.rel (%p526) target = $region32
        $region31: #{tpu_custom_call.1} parent=23 // pred_region
          %s529 = smul.u32 64, %s18
          %s531 = ssub.s32 8192, 8192
          %532 = vsyncadd %s522, %s531
          %s533 = smul.addr %s529, 128
          %s534 = scalar_lea.hbm %s1, %s533
          %s535 = sshll.u32 %s525, 4
          %s536 = int_to_ptr.vmem [resolvable:$true] %s535
          %541 = dma.vmem_to_hbm [thread:$0]  %s536, 8192, %s534, %s522, 128, 128, 8
        $region32: #{tpu_custom_call.1} parent=23 // pred_fallthru
          _
      $region24: #{tpu_custom_call.1} parent=5 // pred_fallthru
        _
      %p542 = scmp.le.s32.totalorder 2, %s13
      // Predicated region
      $region33: #{tpu_custom_call.1} parent=5 // pred_check
        %p543 = pneg %p542
      $region34: #{tpu_custom_call.1} parent=5 // pred_check_branch
        %545 = sbr.rel (%p543) target = $region36
      $region35: #{tpu_custom_call.1} parent=5 // pred_region
        %s546 = ssub.s32 %s13, 2
        // Predicated region
        $region37: #{tpu_custom_call.1} parent=35 // pred_check
          %p547 = pneg %p68
        $region38: #{tpu_custom_call.1} parent=35 // pred_check_branch
          %549 = sbr.rel (%p547) target = $region40
        $region39: #{tpu_custom_call.1} parent=35 // pred_region
          %s550 = sand.u32 %s53, 1
          %s551 = scalar_lea.sflag [#allocation4], %s550
          %s552 = sand.u32 %s53, 1
          %s553 = smul.addr %s552, 512
          %s554 = scalar_lea.vmem [#allocation5], %s553
          %555 = dma.done %s551, 8192
        $region40: #{tpu_custom_call.1} parent=35 // pred_fallthru
          _
      $region36: #{tpu_custom_call.1} parent=5 // pred_fallthru
        _
    $region6: #{tpu_custom_call.1} parent=1 // loop_footer
      %s17 = sadd.s32 1, %s13
    $region7: #{tpu_custom_call.1} parent=1 // loop_footer_branch
      %12 = sbr.rel target = $region3
    $region8: #{tpu_custom_call.1} parent=1 // loop_exit
      _
    %556 = vsyncpa [#allocation3], 1
    %s557 = scalar_lea.sflag [#allocation3], 1
    %558 = vsyncpa %s557, 1
    %559 = vsyncpa [#allocation4], 1
    %s560 = scalar_lea.sflag [#allocation4], 1
    %561 = vsyncpa %s560, 1

</llo_original>
